<compile_context>
chip_gen: v6e
topology: v6e:2x2x1
jax: 0.10.0
libtpu: 0.0.40
codegen_flags: <defaults>
</compile_context>

<pallas_src>
import jax
import jax.numpy as jnp
from jax.experimental import pallas as pl
from jax.experimental.pallas import tpu as pltpu


def center_loss_kernel(labels_ref, x_ref, c_ref, out_ref):
    # labels_ref lives in SMEM (scalar prefetch) and is only consumed by the
    # index_maps; x_ref / c_ref are (1, 1, D) VMEM tiles: this sample's
    # feature row and its own class center (gathered via BlockSpec).
    x = x_ref[...].astype(jnp.float32)               # (1, 1, D)
    c = c_ref[...].astype(jnp.float32)               # (1, 1, D)
    d = x - c
    dist = jnp.sum(d * d, axis=-1, keepdims=True)    # (1, 1, 1)
    # Match torch clamp(min=1e-12, max=1e12).
    out_ref[...] = jnp.clip(dist, 1e-12, 1.0e12)


def center_loss(x, centers, labels):
    """x: (B, D) float, centers: (C, D) float, labels: (B,) int -> scalar f32 loss."""
    B, D = x.shape
    C, _ = centers.shape
    labels_i32 = labels.astype(jnp.int32)

    # Leading size-1 sublane axis keeps every block's last-two dims equal to
    # the full array dims (layout-friendly); the gather happens on the leading
    # row axis through the index_map.  No up-front f32 cast of the whole
    # arrays: tiles are cast in-kernel, so bf16 inputs stay bf16 in HBM.
    x3 = x.reshape(B, 1, D)
    c3 = centers.reshape(C, 1, D)

    per_sample = pl.pallas_call(
        center_loss_kernel,
        out_shape=jax.ShapeDtypeStruct((B, 1, 1), jnp.float32),
        grid_spec=pltpu.PrefetchScalarGridSpec(
            num_scalar_prefetch=1,      # labels -> SMEM, feeds the index_maps
            grid=(B,),
            in_specs=[
                # x row i
                pl.BlockSpec((1, 1, D), lambda i, labels: (i, 0, 0)),
                # centers row labels[i]  (data-dependent gather)
                pl.BlockSpec((1, 1, D), lambda i, labels: (labels[i], 0, 0)),
            ],
            out_specs=pl.BlockSpec((1, 1, 1), lambda i, labels: (i, 0, 0)),
        ),
        compiler_params=pltpu.CompilerParams(
            dimension_semantics=("parallel",),
        ),
    )(labels_i32, x3, c3)

    # TODO(synk): for very large B, emit per-tile lane-dense partial sums
    # instead of one element per sample to amortize the ~0.35us/step overhead.
    return jnp.mean(per_sample)


if __name__ == "__main__":
    # Small deterministic example consistent with the module's forward.
    batch, feat_dim, num_classes = 8, 128, 16

    key = jax.random.PRNGKey(0)
    k_x, k_centers, k_labels = jax.random.split(key, 3)

    x = jax.random.normal(k_x, (batch, feat_dim), dtype=jnp.float32)
    # nn.Parameter(torch.randn(num_classes, feat_dim)) -> deterministic randn here.
    centers = jax.random.normal(k_centers, (num_classes, feat_dim), dtype=jnp.float32)
    labels = jax.random.randint(k_labels, (batch,), 0, num_classes, dtype=jnp.int32)

    loss = center_loss(x, centers, labels)
    jax.block_until_ready(loss)

    # Pure-JAX reference (same semantics as the PyTorch module's forward).
    gathered = centers[labels]                                  # (B, D)
    ref = jnp.mean(jnp.clip(jnp.sum((x - gathered) ** 2, axis=1), 1e-12, 1e12))
    assert jnp.allclose(loss, ref, rtol=1e-5, atol=1e-5), (loss, ref)

    print("KERNEL_OK")
</pallas_src>

<mosaic_0001>
module attributes {stable_mosaic.version = 11 : i64} {
  func.func @center_loss_kernel(%arg0: i32, %arg1: memref<8xi32, #tpu.memory_space<smem>>, %arg2: memref<1x1x128xf32, #tpu.memory_space<vmem>>, %arg3: memref<1x1x128xf32, #tpu.memory_space<vmem>>, %arg4: memref<1x1x1xf32, #tpu.memory_space<vmem>>) attributes {dimension_semantics = [#tpu.dimension_semantics<parallel>], iteration_bounds = array<i64: 8>, scalar_prefetch = 1 : i64, scratch_operands = 0 : i64, tpu.core_type = #tpu.core_type<tc>, window_params = [{transform_indices = @transform_0, window_bounds = array<i64: 1, 1, 128>}, {transform_indices = @transform_1, window_bounds = array<i64: 1, 1, 128>}, {transform_indices = @transform_2, window_bounds = array<i64: 1, 1, 1>}]} {
    %c0 = arith.constant 0 : index
    %c0_0 = arith.constant 0 : index
    %c0_1 = arith.constant 0 : index
    %0 = vector.load %arg2[%c0, %c0_0, %c0_1] : memref<1x1x128xf32, #tpu.memory_space<vmem>>, vector<1x1x128xf32>
    %c0_2 = arith.constant 0 : index
    %c0_3 = arith.constant 0 : index
    %c0_4 = arith.constant 0 : index
    %1 = vector.load %arg3[%c0_2, %c0_3, %c0_4] : memref<1x1x128xf32, #tpu.memory_space<vmem>>, vector<1x1x128xf32>
    %2 = arith.subf %0, %1 : vector<1x1x128xf32>
    %3 = arith.mulf %2, %2 : vector<1x1x128xf32>
    %cst = arith.constant dense<0.000000e+00> : vector<1x1xf32>
    %4 = vector.multi_reduction <add>, %3, %cst [2] : vector<1x1x128xf32> to vector<1x1xf32>
    %5 = vector.shape_cast %4 : vector<1x1xf32> to vector<1x1x1xf32>
    %cst_5 = arith.constant 9.99999996E-13 : f32
    %cst_6 = arith.constant 9.99999995E+11 : f32
    %6 = vector.broadcast %cst_5 : f32 to vector<1x1x1xf32>
    %7 = arith.maximumf %6, %5 : vector<1x1x1xf32>
    %8 = vector.broadcast %cst_6 : f32 to vector<1x1x1xf32>
    %9 = arith.minimumf %8, %7 : vector<1x1x1xf32>
    %c0_7 = arith.constant 0 : index
    %c0_8 = arith.constant 0 : index
    %c0_9 = arith.constant 0 : index
    %10 = vector.load %arg4[%c0_7, %c0_8, %c0_9] : memref<1x1x1xf32, #tpu.memory_space<vmem>>, vector<1x1x1xf32>
    tpu.vector_store %arg4[%c0_7, %c0_8, %c0_9], %9 {strides = array<i32>} : memref<1x1x1xf32, #tpu.memory_space<vmem>>, vector<1x1x1xf32>,
    return
  }
  func.func @transform_0(%arg0: i32, %arg1: memref<8xi32, #tpu.memory_space<smem>>) -> (i32, i32, i32) {
    %c0_i32 = arith.constant 0 : i32
    %c0_i32_0 = arith.constant 0 : i32
    %c0_i32_1 = arith.constant 0 : i32
    return %arg0, %c0_i32, %c0_i32_0 : i32, i32, i32
  }
  func.func @transform_1(%arg0: i32, %arg1: memref<8xi32, #tpu.memory_space<smem>>) -> (i32, i32, i32) {
    %0 = arith.index_cast %arg0 : i32 to index
    %1 = memref.load %arg1[%0] : memref<8xi32, #tpu.memory_space<smem>>
    %c0_i32 = arith.constant 0 : i32
    %c0_i32_0 = arith.constant 0 : i32
    %c0_i32_1 = arith.constant 0 : i32
    return %1, %c0_i32, %c0_i32_0 : i32, i32, i32
  }
  func.func @transform_2(%arg0: i32, %arg1: memref<8xi32, #tpu.memory_space<smem>>) -> (i32, i32, i32) {
    %c0_i32 = arith.constant 0 : i32
    %c0_i32_0 = arith.constant 0 : i32
    %c0_i32_1 = arith.constant 0 : i32
    return %arg0, %c0_i32, %c0_i32_0 : i32, i32, i32
  }
}

</mosaic_0001>

<llo_original>
// kernel: tpu_custom_call.1
$region0: #{tpu_custom_call.1}
  #allocation0 [shape = 'u32[]', space=smem, size = 0x4, offset = 0x4, fixed_abs, tag = 'smem constant byte address 0x4 - core index']
  #allocation1 [shape = 'u32[144,128]{1,0:T(1,128)}', space=vmem, size = 0x12000, scoped, tag = 'internal scratch']
  #allocation2 [shape = 's32[1]{0}', space=sflag, size = 0x4, scoped, tag = 'scoped memory for tpu_custom_call.1']
  #allocation3 [shape = 'u8[512]{0}', space=smem, size = 0x200, scoped, tag = 'prefetched SMEM operand 0']
  %s0 = inlined_call_operand.hbm [shape: s32[8], index: 0, kind: input, shape index: {}]
  %s1 = inlined_call_operand.hbm [shape: f32[8,1,128], index: 1, kind: input, shape index: {}]
  %s2 = inlined_call_operand.hbm [shape: f32[16,1,128], index: 2, kind: input, shape index: {}]
  %s3 = inlined_call_operand.vmem [shape: f32[8,1,1], index: 3, kind: output, shape index: {}]
  %s4 = sld [smem:[#allocation0]]
  $region49: #{tpu_custom_call.1} parent=0
    _
  %s6 = ssub.s32 1, %s4
  %s7 = scalar_select 0, %s6, %s4
  %9 = dma.hbm_to_smem %s0, 16, [#allocation3], [#allocation2]
  %10 = dma.done [#allocation2], 16
  %11 = sfence
  $region1: #{tpu_custom_call.1} parent=0
    #allocation4 [shape = 'u8[1024]{0}', space=vmem, size = 0x400, scoped, tag = 'input window, operand 1']
    #allocation5 [shape = 's32[2]{0}', space=sflag, size = 0x8, scoped, tag = 'scoped memory for tpu_custom_call.1']
    #allocation6 [shape = 'u8[1024]{0}', space=vmem, size = 0x400, scoped, tag = 'input window, operand 2']
    #allocation7 [shape = 's32[2]{0}', space=sflag, size = 0x8, scoped, tag = 'scoped memory for tpu_custom_call.1']
    %12 = vsyncpa [#allocation5], 0
    %s13 = scalar_lea.sflag [#allocation5], 1
    %14 = vsyncpa %s13, 0
    %15 = vsyncpa [#allocation7], 0
    %s16 = scalar_lea.sflag [#allocation7], 1
    %17 = vsyncpa %s16, 0
    loop: start=0, step=1, limit=10
    $region2: #{tpu_custom_call.1} parent=1 // loop_pre_header
      _
    $region3: #{tpu_custom_call.1} parent=1 // loop_header
      %s19 = sphi 0, %s23
      %p20 = scmp.ge.s32.totalorder %s19, 10
      %s29 = sphi 0, %s31
      %s32 = sphi 0, %s29
      %s33 = sphi 0, %s32
      %s49 = sphi 0, %s33
      %s57 = sphi 0, %s59
      %s60 = sphi 0, %s57
      %s61 = sphi 0, %s60
      %s77 = sphi 0, %s61
      %s83 = sphi 0, %s85
      %s86 = sphi 0, %s83
      %s87 = sphi 0, %s86
      %s103 = sphi 0, %s87
    $region4: #{tpu_custom_call.1} parent=1 // loop_header_branch
      %22 = sbr.rel (%p20) target = $region8
    $region5: #{tpu_custom_call.1} parent=1 // loop_body
      %s24 = ssub.s32 %s19, 1
      %s25 = ssub.s32 %s19, 2
      %s26 = sadd.s32 %s19, 1
      %s27 = ssub.s32 %s19, %s26
      %p28 = scmp.eq.s32.totalorder %s27, 0
      %s30 = sadd.s32 %s29, 1
      %s31 = scalar_select %p28, %s29, %s30
      %p34 = pneg %p28
      %p35 = scmp.eq.s32.totalorder %s19, 7
      %p36 = por %p34, %p35
      %p37 = scmp.ne.s32.totalorder %s29, %s32
      %p38 = scmp.eq.s32.totalorder %s19, 0
      %p39 = por %p37, %p38
      %p40 = scmp.ne.s32.totalorder %s29, %s32
      %p41 = scmp.eq.s32.totalorder %s24, 7
      %p42 = por %p40, %p41
      %p43 = scmp.ne.s32.totalorder %s32, %s33
      %p44 = scmp.eq.s32.totalorder %s24, 0
      %p45 = por %p43, %p44
      %p46 = scmp.ne.s32.totalorder %s32, %s33
      %p47 = scmp.eq.s32.totalorder %s25, 7
      %p48 = por %p46, %p47
      %p50 = scmp.ne.s32.totalorder %s33, %s49
      %p51 = scmp.eq.s32.totalorder %s25, 0
      %p52 = por %p50, %p51
      %s53 = sld [smem:[#allocation3 + %s19]]
      %s54 = sld [smem:[#allocation3 + %s26]]
      %s55 = ssub.s32 %s53, %s54
      %p56 = scmp.eq.s32.totalorder %s55, 0
      %s58 = sadd.s32 %s57, 1
      %s59 = scalar_select %p56, %s57, %s58
      %p62 = pneg %p56
      %p63 = scmp.eq.s32.totalorder %s19, 7
      %p64 = por %p62, %p63
      %p65 = scmp.ne.s32.totalorder %s57, %s60
      %p66 = scmp.eq.s32.totalorder %s19, 0
      %p67 = por %p65, %p66
      %p68 = scmp.ne.s32.totalorder %s57, %s60
      %p69 = scmp.eq.s32.totalorder %s24, 7
      %p70 = por %p68, %p69
      %p71 = scmp.ne.s32.totalorder %s60, %s61
      %p72 = scmp.eq.s32.totalorder %s24, 0
      %p73 = por %p71, %p72
      %p74 = scmp.ne.s32.totalorder %s60, %s61
      %p75 = scmp.eq.s32.totalorder %s25, 7
      %p76 = por %p74, %p75
      %p78 = scmp.ne.s32.totalorder %s61, %s77
      %p79 = scmp.eq.s32.totalorder %s25, 0
      %p80 = por %p78, %p79
      %s81 = ssub.s32 %s19, %s26
      %p82 = scmp.eq.s32.totalorder %s81, 0
      %s84 = sadd.s32 %s83, 1
      %s85 = scalar_select %p82, %s83, %s84
      %p88 = pneg %p82
      %p89 = scmp.eq.s32.totalorder %s19, 7
      %p90 = por %p88, %p89
      %p91 = scmp.ne.s32.totalorder %s83, %s86
      %p92 = scmp.eq.s32.totalorder %s19, 0
      %p93 = por %p91, %p92
      %p94 = scmp.ne.s32.totalorder %s83, %s86
      %p95 = scmp.eq.s32.totalorder %s24, 7
      %p96 = por %p94, %p95
      %p97 = scmp.ne.s32.totalorder %s86, %s87
      %p98 = scmp.eq.s32.totalorder %s24, 0
      %p99 = por %p97, %p98
      %p100 = scmp.ne.s32.totalorder %s86, %s87
      %p101 = scmp.eq.s32.totalorder %s25, 7
      %p102 = por %p100, %p101
      %p104 = scmp.ne.s32.totalorder %s87, %s103
      %p105 = scmp.eq.s32.totalorder %s25, 0
      %p106 = por %p104, %p105
      %p107 = scmp.le.s32.totalorder 1, %s19
      %p108 = scmp.lt.s32.totalorder %s19, 9
      %p109 = pnand %p107, %p108
      %p110 = pneg %p109
      // Predicated region
      $region9: #{tpu_custom_call.1} parent=5 // pred_check
        _
      $region10: #{tpu_custom_call.1} parent=5 // pred_check_branch
        %112 = sbr.rel (%p109) target = $region12
      $region11: #{tpu_custom_call.1} parent=5 // pred_region
        %s113 = ssub.s32 %s19, 1
      $region12: #{tpu_custom_call.1} parent=5 // pred_fallthru
        _
      %p114 = scmp.lt.s32.totalorder %s19, 8
      // Predicated region
      $region13: #{tpu_custom_call.1} parent=5 // pred_check
        %p115 = pneg %p114
      $region14: #{tpu_custom_call.1} parent=5 // pred_check_branch
        %117 = sbr.rel (%p115) target = $region16
      $region15: #{tpu_custom_call.1} parent=5 // pred_region
        // Predicated region
        $region17: #{tpu_custom_call.1} parent=15 // pred_check
          %p118 = pneg %p39
        $region18: #{tpu_custom_call.1} parent=15 // pred_check_branch
          %120 = sbr.rel (%p118) target = $region20
        $region19: #{tpu_custom_call.1} parent=15 // pred_region
          %s121 = sand.u32 %s29, 1
          %s122 = scalar_lea.sflag [#allocation5], %s121
          %s123 = sand.u32 %s29, 1
          %s124 = scalar_lea.vmem [#allocation4], %s123
          %s126 = ssub.s32 16, 16
          %127 = vsyncadd %s122, %s126
          %s128 = smul.addr %s19, 16
          %s129 = scalar_lea.hbm %s1, %s128
          %s131 = sshll.u32 %s124, 4
          %s132 = int_to_ptr.vmem [resolvable:$true] %s131
          %134 = dma.hbm_to_vmem [thread:$0]  %s129, 16, %s132, %s122
        $region20: #{tpu_custom_call.1} parent=15 // pred_fallthru
          _
        // Predicated region
        $region21: #{tpu_custom_call.1} parent=15 // pred_check
          %p135 = pneg %p67
        $region22: #{tpu_custom_call.1} parent=15 // pred_check_branch
          %137 = sbr.rel (%p135) target = $region24
        $region23: #{tpu_custom_call.1} parent=15 // pred_region
          %s138 = sand.u32 %s57, 1
          %s139 = scalar_lea.sflag [#allocation7], %s138
          %s140 = sand.u32 %s57, 1
          %s141 = scalar_lea.vmem [#allocation6], %s140
          %s142 = sld [smem:[#allocation3 + %s19]]
          %s144 = ssub.s32 16, 16
          %145 = vsyncadd %s139, %s144
          %s146 = smul.addr %s142, 16
          %s147 = scalar_lea.hbm %s2, %s146
          %s149 = sshll.u32 %s141, 4
          %s150 = int_to_ptr.vmem [resolvable:$true] %s149
          %152 = dma.hbm_to_vmem [thread:$0]  %s147, 16, %s150, %s139
        $region24: #{tpu_custom_call.1} parent=15 // pred_fallthru
          _
      $region16: #{tpu_custom_call.1} parent=5 // pred_fallthru
        _
      %p153 = scmp.le.s32.totalorder 1, %s19
      %p154 = scmp.lt.s32.totalorder %s19, 9
      %p155 = pnand %p153, %p154
      %p156 = pneg %p155
      // Predicated region
      $region25: #{tpu_custom_call.1} parent=5 // pred_check
        _
      $region26: #{tpu_custom_call.1} parent=5 // pred_check_branch
        %158 = sbr.rel (%p155) target = $region28
      $region27: #{tpu_custom_call.1} parent=5 // pred_region
        %s159 = ssub.s32 %s19, 1
        %s160 = sand.u32 %s32, 1
        %s161 = scalar_lea.sflag [#allocation5], %s160
        %s162 = sand.u32 %s32, 1
        %s163 = scalar_lea.vmem [#allocation4], %s162
        // Predicated region
        $region29: #{tpu_custom_call.1} parent=27 // pred_check
          %p164 = pneg %p45
        $region30: #{tpu_custom_call.1} parent=27 // pred_check_branch
          %166 = sbr.rel (%p164) target = $region32
        $region31: #{tpu_custom_call.1} parent=27 // pred_region
          %167 = dma.done %s161, 16
        $region32: #{tpu_custom_call.1} parent=27 // pred_fallthru
          _
        %s168 = sand.u32 %s60, 1
        %s169 = scalar_lea.sflag [#allocation7], %s168
        %s170 = sand.u32 %s60, 1
        %s171 = scalar_lea.vmem [#allocation6], %s170
        // Predicated region
        $region33: #{tpu_custom_call.1} parent=27 // pred_check
          %p172 = pneg %p73
        $region34: #{tpu_custom_call.1} parent=27 // pred_check_branch
          %174 = sbr.rel (%p172) target = $region36
        $region35: #{tpu_custom_call.1} parent=27 // pred_region
          %175 = dma.done %s169, 16
        $region36: #{tpu_custom_call.1} parent=27 // pred_fallthru
          _
        %s176 = sand.u32 %s32, 1
        %s177 = scalar_lea.sflag [#allocation5], %s176
        %s178 = sand.u32 %s32, 1
        %s179 = scalar_lea.vmem [#allocation4], %s178
        %p180 = pneg %p45
        %p181 = pneg %p42
        %s182 = sand.u32 %s60, 1
        %s183 = scalar_lea.sflag [#allocation7], %s182
        %s184 = sand.u32 %s60, 1
        %s185 = scalar_lea.vmem [#allocation6], %s184
        %p186 = pneg %p73
        %p187 = pneg %p70
        %p188 = pneg %p99
        %p189 = pneg %p96
        %p190 = scmp.lt.s32.totalorder %s24, 7
        %s191 = scalar_select %p190, %s24, 7
        %s192 = scalar_lea.vmem %s3, %s191
        %s193 = sld [smem:[#allocation3 + %s24]]
        %p194 = scmp.lt.s32.totalorder %s24, 7
        %s195 = scalar_select %p194, %s24, 7
        %s196 = scalar_lea.vmem %s3, %s195
        %v197 = vld [vmem:[%s163] sm:$0x1]
        %v198 = vld [vmem:[%s171] sm:$0x1]
        %v199 = vsub.f32 %v197, %v198
        %v200 = vmul.f32 %v199, %v199
        %vm201 = vcmask 1040384
        %v202 = vsel %vm201, %v200, 0.0
        %203 = vadd.xlane.f32.xlu0 %v202
        %v204 = vpop.xlane.xlu0 %203
        %v205 = vmax.f32 %v204, 1e-12
        %v206 = vmin.f32 %v205, 1e+12
        %vm207 = vcmask 0
        %208 = vst.msk [vmem:[%s196] sm:$0x1] %vm207, %v206
        %p209 = scmp.lt.s32.totalorder %s24, 7
        %s210 = scalar_select %p209, %s24, 7
        %s211 = scalar_lea.vmem %s3, %s210
        // Predicated region
        $region37: #{tpu_custom_call.1} parent=27 // pred_check
          %p212 = pneg %p96
        $region38: #{tpu_custom_call.1} parent=27 // pred_check_branch
          %214 = sbr.rel (%p212) target = $region40
        $region39: #{tpu_custom_call.1} parent=27 // pred_region
          _
        $region40: #{tpu_custom_call.1} parent=27 // pred_fallthru
          _
      $region28: #{tpu_custom_call.1} parent=5 // pred_fallthru
        _
      %p215 = scmp.le.s32.totalorder 2, %s19
      // Predicated region
      $region41: #{tpu_custom_call.1} parent=5 // pred_check
        %p216 = pneg %p215
      $region42: #{tpu_custom_call.1} parent=5 // pred_check_branch
        %218 = sbr.rel (%p216) target = $region44
      $region43: #{tpu_custom_call.1} parent=5 // pred_region
        %s219 = ssub.s32 %s19, 2
        // Predicated region
        $region45: #{tpu_custom_call.1} parent=43 // pred_check
          %p220 = pneg %p102
        $region46: #{tpu_custom_call.1} parent=43 // pred_check_branch
          %222 = sbr.rel (%p220) target = $region48
        $region47: #{tpu_custom_call.1} parent=43 // pred_region
          %p223 = scmp.lt.s32.totalorder %s25, 7
          %s224 = scalar_select %p223, %s25, 7
          %s225 = scalar_lea.vmem %s3, %s224
        $region48: #{tpu_custom_call.1} parent=43 // pred_fallthru
          _
      $region44: #{tpu_custom_call.1} parent=5 // pred_fallthru
        _
    $region6: #{tpu_custom_call.1} parent=1 // loop_footer
      %s23 = sadd.s32 1, %s19
    $region7: #{tpu_custom_call.1} parent=1 // loop_footer_branch
      %18 = sbr.rel target = $region3
    $region8: #{tpu_custom_call.1} parent=1 // loop_exit
      _
    %226 = vsyncpa [#allocation5], 1
    %s227 = scalar_lea.sflag [#allocation5], 1
    %228 = vsyncpa %s227, 1
    %229 = vsyncpa [#allocation7], 1
    %s230 = scalar_lea.sflag [#allocation7], 1
    %231 = vsyncpa %s230, 1

</llo_original>
